<compile_context>
chip_gen: v7x
topology: tpu7x:2x2x1
jax: 0.10.0
libtpu: 0.0.40
codegen_flags: <defaults>
</compile_context>

<pallas_src>
import functools

import jax
import jax.numpy as jnp
from jax.experimental import pallas as pl
from jax.experimental.pallas import tpu as pltpu


def _zero_linear_kernel(x_ref, w_ref, b_ref, o_ref, acc_ref):
    """One (tm, tn) output tile of the fused ZeRO forward, accumulated over K.

    x_ref  : [tm, tk] 16-bit activations (already cast in the wrapper)
    w_ref  : [tk, tn] 16-bit gathered parameter tile, pre-transposed to (in, out)
    b_ref  : [1,  tn] 16-bit bias tile
    o_ref  : [tm, tn] 16-bit output tile
    acc_ref: [tm, tn] f32 accumulator scratch, resident across the K grid axis
    """
    k = pl.program_id(2)

    @pl.when(k == 0)
    def _init():
        # Fold the bias into the accumulator init: added exactly once per
        # output tile, and kept off the epilogue / store path.
        acc_ref[...] = jnp.broadcast_to(
            b_ref[...].astype(jnp.float32), acc_ref.shape)

    # 16-bit operands straight to the MXU, f32 accumulation.
    acc_ref[...] += jnp.dot(
        x_ref[...], w_ref[...], preferred_element_type=jnp.float32)

    @pl.when(k == pl.num_programs(2) - 1)
    def _finalize():
        o_ref[...] = acc_ref[...].astype(o_ref.dtype)


def _vmem_capacity_bytes():
    """Best-effort trace-time VMEM capacity query; conservative fallback."""
    try:
        info = pltpu.get_tpu_info()
        cap = getattr(info, "vmem_capacity_bytes", None)
        if cap:
            return int(cap)
    except Exception:
        pass
    return 64 * 1024 * 1024  # conservative (v7x-class) fallback


def _auto_config():
    """Generation-dependent tile defaults + VMEM budget."""
    cap = _vmem_capacity_bytes()
    if cap <= 64 * 1024 * 1024:
        # v7x-class: 64 MiB VMEM per TensorCore.  Double-buffered bf16
        # 1024x1024 tiles + f32 acc ~= 16 MiB << 48 MiB, well past the
        # ~310 flop/byte roofline break-even.
        return 1024, 1024, 1024, 48 * 1024 * 1024
    # v5e / v6e: 128 MiB physical VMEM -> raise the scoped limit and grow the
    # lane-dense output axis (v6e needs ~650+ flop/byte to reach the MXU).
    return 1024, 2048, 1024, 100 * 1024 * 1024


def sharded_model_v2_forward(x, weight, bias, *, compute_dtype=jnp.bfloat16,
                             tm=None, tn=None, tk=None, vmem_limit_bytes=None):
    """ShardedModelV2.forward for a wrapped nn.Linear.

    x:      [M, K]  float input; cast to `compute_dtype` here (the ZeRO
                    cast_float_arguments step), then streamed at 2 B/elem
    weight: [N, K]  16-bit gathered params, PyTorch (out_features, in_features)
    bias:   [N]     16-bit bias
    returns [M, N]  compute_dtype

    Note: compute_dtype=jnp.float16 is only approximate vs PyTorch fp16 —
    the TPU MXU low-precision path is bf16 and accumulation order differs.
    """
    M, K = x.shape
    N, Kw = weight.shape
    assert K == Kw and bias.shape == (N,)

    a_tm, a_tn, a_tk, a_vmem = _auto_config()
    tm = a_tm if tm is None else tm
    tn = a_tn if tn is None else tn
    tk = a_tk if tk is None else tk
    vmem_limit_bytes = a_vmem if vmem_limit_bytes is None else vmem_limit_bytes

    # Clamp production-sized default tiles to the actual problem size.
    tm = min(tm, M)
    tn = min(tn, N)
    tk = min(tk, K)

    # Keep both TensorCores busy on v7x (2 TCs sharded over the parallel grid
    # axes): ensure >= 2 independent (i, j) output blocks when possible.
    # Costs at most one extra ~0.35 us grid step on single-TC parts.
    if (M // tm) * (N // tn) < 2:
        if tn >= 256 and N % (tn // 2) == 0:
            tn //= 2
        elif tm >= 16 and M % (tm // 2) == 0 and (tm // 2) % 8 == 0:
            tm //= 2

    # TODO(synk): real ZeRO shapes (ragged batch, odd hidden sizes) would need
    # padding / Element-indexed edge tiles; this wrapper requires divisibility.
    assert M % tm == 0 and N % tn == 0 and K % tk == 0, (
        "this wrapper requires tile-divisible shapes")

    grid = (M // tm, N // tn, K // tk)

    # ZeRO 16-bit cast of the activations (cast_float_arguments) done once,
    # upstream of the kernel, so the kernel streams 16-bit x from HBM.
    x16 = x.astype(compute_dtype)
    w16 = weight.astype(compute_dtype)
    b16 = bias.astype(compute_dtype)

    # One-time transpose to [K, N] (in production this is fused into the ZeRO
    # param gather); avoids any per-K-step in-kernel transpose competing with
    # the MXU push slot.
    w_t = w16.T
    b2d = b16.reshape(1, N)  # 2-D so the lane axis carries the features

    # TODO(synk): if a bundle dump shows exposed DMA waits at K-step
    # boundaries, sweep pipeline_mode=pl.Buffered(3) on the x / weight specs.
    return pl.pallas_call(
        _zero_linear_kernel,
        out_shape=jax.ShapeDtypeStruct((M, N), compute_dtype),
        grid=grid,
        in_specs=[
            pl.BlockSpec((tm, tk), lambda i, j, k: (i, k)),   # activations
            pl.BlockSpec((tk, tn), lambda i, j, k: (k, j)),   # weight (in, out)
            pl.BlockSpec((1, tn), lambda i, j, k: (0, j)),    # bias
        ],
        out_specs=pl.BlockSpec((tm, tn), lambda i, j, k: (i, j)),
        scratch_shapes=[pltpu.VMEM((tm, tn), jnp.float32)],
        compiler_params=pltpu.CompilerParams(
            dimension_semantics=("parallel", "parallel", "arbitrary"),
            vmem_limit_bytes=vmem_limit_bytes,
        ),
    )(x16, w_t, b2d)


# TODO(synk): backward-path machinery (reduce-scatter grad hooks, bucketed
# ReduceScatterBucketer, CPU offload, memory tracer) has no forward-pass
# Pallas equivalent and is intentionally not modeled here.


if __name__ == "__main__":
    key = jax.random.PRNGKey(0)
    kx, kw, kb = jax.random.split(key, 3)

    # Small, lane-aligned demo shapes.  Auto tile selection clamps the
    # production-sized tiles down and still exercises a multi-block parallel
    # grid (the >=2-output-block rule splits the N axis).
    batch, in_features, out_features = 64, 256, 256
    cd = jnp.bfloat16   # TPU-native 16-bit compute copies
                        # (jnp.float16 only approximates PyTorch fp16)

    x = jax.random.normal(kx, (batch, in_features), dtype=jnp.float32)
    weight = (jax.random.normal(kw, (out_features, in_features), jnp.float32)
              * 0.1).astype(cd)
    bias = (jax.random.normal(kb, (out_features,), jnp.float32) * 0.1).astype(cd)

    out = sharded_model_v2_forward(x, weight, bias, compute_dtype=cd)
    out = jax.block_until_ready(out)

    # Pure-JAX reference with the same mixed-precision semantics.
    ref = (jnp.dot(x.astype(cd).astype(jnp.float32),
                   weight.astype(jnp.float32).T,
                   preferred_element_type=jnp.float32)
           + bias.astype(jnp.float32)).astype(cd)

    assert out.shape == (batch, out_features)
    assert out.dtype == cd
    assert jnp.allclose(out.astype(jnp.float32), ref.astype(jnp.float32),
                        atol=2e-2, rtol=2e-2)

    print("KERNEL_OK")
</pallas_src>

<mosaic_0001>
module attributes {stable_mosaic.version = 11 : i64} {
  func.func @_zero_linear_kernel(%arg0: i32, %arg1: i32, %arg2: i32, %arg3: memref<64x256xbf16, #tpu.memory_space<vmem>>, %arg4: memref<256x128xbf16, #tpu.memory_space<vmem>>, %arg5: memref<1x128xbf16, #tpu.memory_space<vmem>>, %arg6: memref<64x128xbf16, #tpu.memory_space<vmem>>, %arg7: memref<64x128xf32, #tpu.memory_space<vmem>>) attributes {dimension_semantics = [#tpu.dimension_semantics<parallel>, #tpu.dimension_semantics<parallel>, #tpu.dimension_semantics<arbitrary>], iteration_bounds = array<i64: 1, 2, 1>, scalar_prefetch = 0 : i64, scratch_operands = 1 : i64, tpu.core_type = #tpu.core_type<tc>, window_params = [{transform_indices = @transform_0, window_bounds = array<i64: 64, 256>}, {transform_indices = @transform_1, window_bounds = array<i64: 256, 128>}, {transform_indices = @transform_2, window_bounds = array<i64: 1, 128>}, {transform_indices = @transform_3, window_bounds = array<i64: 64, 128>}]} {
    %c0_i32 = arith.constant 0 : i32
    %0 = arith.cmpi eq, %arg2, %c0_i32 : i32
    %1 = arith.extui %0 : i1 to i32
    %c0_i32_0 = arith.constant 0 : i32
    %2 = arith.cmpi ne, %1, %c0_i32_0 : i32
    scf.if %2 {
      %c0_10 = arith.constant 0 : index
      %c0_11 = arith.constant 0 : index
      %12 = vector.load %arg5[%c0_10, %c0_11] : memref<1x128xbf16, #tpu.memory_space<vmem>>, vector<1x128xbf16>
      %13 = arith.extf %12 : vector<1x128xbf16> to vector<1x128xf32>
      %14 = vector.shape_cast %13 : vector<1x128xf32> to vector<1x128xf32>
      %15 = vector.broadcast %14 : vector<1x128xf32> to vector<64x128xf32>
      %c0_12 = arith.constant 0 : index
      %c0_13 = arith.constant 0 : index
      %16 = vector.load %arg7[%c0_12, %c0_13] : memref<64x128xf32, #tpu.memory_space<vmem>>, vector<64x128xf32>
      tpu.vector_store %arg7[%c0_12, %c0_13], %15 {strides = array<i32>} : memref<64x128xf32, #tpu.memory_space<vmem>>, vector<64x128xf32>,
    } else {
    }
    %c0 = arith.constant 0 : index
    %c0_1 = arith.constant 0 : index
    %3 = vector.load %arg7[%c0, %c0_1] : memref<64x128xf32, #tpu.memory_space<vmem>>, vector<64x128xf32>
    %c0_2 = arith.constant 0 : index
    %c0_3 = arith.constant 0 : index
    %4 = vector.load %arg3[%c0_2, %c0_3] : memref<64x256xbf16, #tpu.memory_space<vmem>>, vector<64x256xbf16>
    %c0_4 = arith.constant 0 : index
    %c0_5 = arith.constant 0 : index
    %5 = vector.load %arg4[%c0_4, %c0_5] : memref<256x128xbf16, #tpu.memory_space<vmem>>, vector<256x128xbf16>
    %cst = arith.constant dense<0.000000e+00> : vector<64x128xf32>
    %6 = tpu.matmul %4, %5, %cst {dimension_numbers = #tpu.dot_dimension_numbers<[1], [0], [0], [1], [0, 0, 1, 1], [], []>} : vector<64x256xbf16>, vector<256x128xbf16>, vector<64x128xf32> -> vector<64x128xf32>
    %7 = arith.addf %3, %6 : vector<64x128xf32>
    %c0_6 = arith.constant 0 : index
    %c0_7 = arith.constant 0 : index
    %8 = vector.load %arg7[%c0_6, %c0_7] : memref<64x128xf32, #tpu.memory_space<vmem>>, vector<64x128xf32>
    tpu.vector_store %arg7[%c0_6, %c0_7], %7 {strides = array<i32>} : memref<64x128xf32, #tpu.memory_space<vmem>>, vector<64x128xf32>,
    %c0_i32_8 = arith.constant 0 : i32
    %9 = arith.cmpi eq, %arg2, %c0_i32_8 : i32
    %10 = arith.extui %9 : i1 to i32
    %c0_i32_9 = arith.constant 0 : i32
    %11 = arith.cmpi ne, %10, %c0_i32_9 : i32
    scf.if %11 {
      %c0_10 = arith.constant 0 : index
      %c0_11 = arith.constant 0 : index
      %12 = vector.load %arg7[%c0_10, %c0_11] : memref<64x128xf32, #tpu.memory_space<vmem>>, vector<64x128xf32>
      %13 = arith.truncf %12 : vector<64x128xf32> to vector<64x128xbf16>
      %c0_12 = arith.constant 0 : index
      %c0_13 = arith.constant 0 : index
      %14 = vector.load %arg6[%c0_12, %c0_13] : memref<64x128xbf16, #tpu.memory_space<vmem>>, vector<64x128xbf16>
      tpu.vector_store %arg6[%c0_12, %c0_13], %13 {strides = array<i32>} : memref<64x128xbf16, #tpu.memory_space<vmem>>, vector<64x128xbf16>,
    } else {
    }
    return
  }
  func.func @transform_0(%arg0: i32, %arg1: i32, %arg2: i32) -> (i32, i32) {
    %c0_i32 = arith.constant 0 : i32
    return %arg0, %arg2 : i32, i32
  }
  func.func @transform_1(%arg0: i32, %arg1: i32, %arg2: i32) -> (i32, i32) {
    %c0_i32 = arith.constant 0 : i32
    return %arg2, %arg1 : i32, i32
  }
  func.func @transform_2(%arg0: i32, %arg1: i32, %arg2: i32) -> (i32, i32) {
    %c0_i32 = arith.constant 0 : i32
    %c0_i32_0 = arith.constant 0 : i32
    return %c0_i32, %arg1 : i32, i32
  }
  func.func @transform_3(%arg0: i32, %arg1: i32, %arg2: i32) -> (i32, i32) {
    %c0_i32 = arith.constant 0 : i32
    return %arg0, %arg1 : i32, i32
  }
}

</mosaic_0001>

<llo_original>
// kernel: tpu_custom_call.1
$region0: #{tpu_custom_call.1}
  #allocation0 [shape = 'u32[]', space=smem, size = 0x4, offset = 0x4, fixed_abs, tag = 'smem constant byte address 0x4 - core index']
  #allocation1 [shape = 'u32[144,128]{1,0:T(1,128)}', space=vmem, size = 0x12000, scoped, tag = 'internal scratch']
  #allocation2 [shape = 'f32[64,128]{1,0:T(8,128)}', space=vmem, size = 0x8000, scoped, tag = 'scratch operand']
  %s0 = inlined_call_operand.hbm [shape: bf16[64,256], index: 0, kind: input, shape index: {}]
  %s1 = inlined_call_operand.hbm [shape: bf16[256,256], index: 1, kind: input, shape index: {}]
  %s2 = inlined_call_operand.vmem [shape: bf16[1,256], index: 2, kind: input, shape index: {}]
  %s3 = inlined_call_operand.hbm [shape: bf16[64,256], index: 3, kind: output, shape index: {}]
  %s4 = sld [smem:[#allocation0]]
  $region61: #{tpu_custom_call.1} parent=0
    _
  %s6 = ssub.s32 1, %s4
  %s7 = scalar_select 0, %s6, %s4
  $region1: #{tpu_custom_call.1} parent=0
    #allocation3 [shape = 'u8[32768]{0}', space=vmem, size = 0x8000, scoped, tag = 'input window, operand 0, single buffered']
    #allocation4 [shape = 's32[2]{0}', space=sflag, size = 0x8, scoped, tag = 'scoped memory for tpu_custom_call.1']
    #allocation5 [shape = 's32[2]{0}', space=sflag, size = 0x8, scoped, tag = 'scoped memory for tpu_custom_call.1']
    #allocation6 [shape = 'u8[131072]{0}', space=vmem, size = 0x20000, scoped, tag = 'input window, operand 1']
    #allocation7 [shape = 's32[2]{0}', space=sflag, size = 0x8, scoped, tag = 'scoped memory for tpu_custom_call.1']
    #allocation8 [shape = 'u8[32768]{0}', space=vmem, size = 0x8000, scoped, tag = 'output window, operand 0']
    %8 = vsyncpa [#allocation4], 0
    %9 = vsyncpa [#allocation7], 0
    %s10 = scalar_lea.sflag [#allocation7], 1
    %11 = vsyncpa %s10, 0
    %12 = vsyncpa [#allocation5], 0
    %s13 = scalar_lea.sflag [#allocation5], 1
    %14 = vsyncpa %s13, 0
    loop: start=0, step=1, limit=4
    $region2: #{tpu_custom_call.1} parent=1 // loop_pre_header
      _
    $region3: #{tpu_custom_call.1} parent=1 // loop_header
      %s16 = sphi 0, %s20
      %p17 = scmp.ge.s32.totalorder %s16, 4
      %s23 = sphi 0, %s42
      %s24 = sphi 0, %s38
      %s25 = sphi 0, %s34
      %s26 = sphi 0, %s23
      %s27 = sphi 0, %s24
      %s28 = sphi 0, %s25
      %s29 = sphi 0, %s26
      %s30 = sphi 0, %s27
      %s31 = sphi 0, %s28
      %s47 = sphi 0, %s49
      %s50 = sphi 0, %s47
      %s51 = sphi 0, %s50
      %s67 = sphi 0, %s51
      %s75 = sphi 0, %s77
      %s78 = sphi 0, %s75
      %s79 = sphi 0, %s78
      %s95 = sphi 0, %s79
      %s101 = sphi 0, %s103
      %s104 = sphi 0, %s101
      %s105 = sphi 0, %s104
      %s121 = sphi 0, %s105
      %s129 = sphi 0, %s131
      %s132 = sphi 0, %s129
      %s133 = sphi 0, %s132
      %s149 = sphi 0, %s133
    $region4: #{tpu_custom_call.1} parent=1 // loop_header_branch
      %19 = sbr.rel (%p17) target = $region8
    $region5: #{tpu_custom_call.1} parent=1 // loop_body
      %s21 = ssub.s32 %s16, 1
      %s22 = ssub.s32 %s16, 2
      %s32 = sadd.s32 1, %s25
      %p33 = scmp.ge.s32.totalorder %s32, 1
      %s34 = scalar_select %p33, 0, %s32
      %s35 = sadd.s32 1, %s24
      %s36 = scalar_select %p33, %s35, %s24
      %p37 = scmp.ge.s32.totalorder %s36, 2
      %s38 = scalar_select %p37, 0, %s36
      %s39 = sadd.s32 1, %s23
      %s40 = scalar_select %p37, %s39, %s23
      %p41 = scmp.ge.s32.totalorder %s40, 1
      %s42 = scalar_select %p41, 0, %s40
      %s43 = ssub.s32 %s23, %s42
      %s44 = ssub.s32 %s25, %s34
      %s45 = sor.u32 %s43, %s44
      %p46 = scmp.eq.s32.totalorder %s45, 0
      %s48 = sadd.s32 %s47, 1
      %s49 = scalar_select %p46, %s47, %s48
      %p52 = pneg %p46
      %p53 = scmp.eq.s32.totalorder %s16, 1
      %p54 = por %p52, %p53
      %p55 = scmp.ne.s32.totalorder %s47, %s50
      %p56 = scmp.eq.s32.totalorder %s16, 0
      %p57 = por %p55, %p56
      %p58 = scmp.ne.s32.totalorder %s47, %s50
      %p59 = scmp.eq.s32.totalorder %s21, 1
      %p60 = por %p58, %p59
      %p61 = scmp.ne.s32.totalorder %s50, %s51
      %p62 = scmp.eq.s32.totalorder %s21, 0
      %p63 = por %p61, %p62
      %p64 = scmp.ne.s32.totalorder %s50, %s51
      %p65 = scmp.eq.s32.totalorder %s22, 1
      %p66 = por %p64, %p65
      %p68 = scmp.ne.s32.totalorder %s51, %s67
      %p69 = scmp.eq.s32.totalorder %s22, 0
      %p70 = por %p68, %p69
      %s71 = ssub.s32 %s25, %s34
      %s72 = ssub.s32 %s24, %s38
      %s73 = sor.u32 %s71, %s72
      %p74 = scmp.eq.s32.totalorder %s73, 0
      %s76 = sadd.s32 %s75, 1
      %s77 = scalar_select %p74, %s75, %s76
      %p80 = pneg %p74
      %p81 = scmp.eq.s32.totalorder %s16, 1
      %p82 = por %p80, %p81
      %p83 = scmp.ne.s32.totalorder %s75, %s78
      %p84 = scmp.eq.s32.totalorder %s16, 0
      %p85 = por %p83, %p84
      %p86 = scmp.ne.s32.totalorder %s75, %s78
      %p87 = scmp.eq.s32.totalorder %s21, 1
      %p88 = por %p86, %p87
      %p89 = scmp.ne.s32.totalorder %s78, %s79
      %p90 = scmp.eq.s32.totalorder %s21, 0
      %p91 = por %p89, %p90
      %p92 = scmp.ne.s32.totalorder %s78, %s79
      %p93 = scmp.eq.s32.totalorder %s22, 1
      %p94 = por %p92, %p93
      %p96 = scmp.ne.s32.totalorder %s79, %s95
      %p97 = scmp.eq.s32.totalorder %s22, 0
      %p98 = por %p96, %p97
      %s99 = ssub.s32 %s24, %s38
      %p100 = scmp.eq.s32.totalorder %s99, 0
      %s102 = sadd.s32 %s101, 1
      %s103 = scalar_select %p100, %s101, %s102
      %p106 = pneg %p100
      %p107 = scmp.eq.s32.totalorder %s16, 1
      %p108 = por %p106, %p107
      %p109 = scmp.ne.s32.totalorder %s101, %s104
      %p110 = scmp.eq.s32.totalorder %s16, 0
      %p111 = por %p109, %p110
      %p112 = scmp.ne.s32.totalorder %s101, %s104
      %p113 = scmp.eq.s32.totalorder %s21, 1
      %p114 = por %p112, %p113
      %p115 = scmp.ne.s32.totalorder %s104, %s105
      %p116 = scmp.eq.s32.totalorder %s21, 0
      %p117 = por %p115, %p116
      %p118 = scmp.ne.s32.totalorder %s104, %s105
      %p119 = scmp.eq.s32.totalorder %s22, 1
      %p120 = por %p118, %p119
      %p122 = scmp.ne.s32.totalorder %s105, %s121
      %p123 = scmp.eq.s32.totalorder %s22, 0
      %p124 = por %p122, %p123
      %s125 = ssub.s32 %s23, %s42
      %s126 = ssub.s32 %s24, %s38
      %s127 = sor.u32 %s125, %s126
      %p128 = scmp.eq.s32.totalorder %s127, 0
      %s130 = sadd.s32 %s129, 1
      %s131 = scalar_select %p128, %s129, %s130
      %p134 = pneg %p128
      %p135 = scmp.eq.s32.totalorder %s16, 1
      %p136 = por %p134, %p135
      %p137 = scmp.ne.s32.totalorder %s129, %s132
      %p138 = scmp.eq.s32.totalorder %s16, 0
      %p139 = por %p137, %p138
      %p140 = scmp.ne.s32.totalorder %s129, %s132
      %p141 = scmp.eq.s32.totalorder %s21, 1
      %p142 = por %p140, %p141
      %p143 = scmp.ne.s32.totalorder %s132, %s133
      %p144 = scmp.eq.s32.totalorder %s21, 0
      %p145 = por %p143, %p144
      %p146 = scmp.ne.s32.totalorder %s132, %s133
      %p147 = scmp.eq.s32.totalorder %s22, 1
      %p148 = por %p146, %p147
      %p150 = scmp.ne.s32.totalorder %s133, %s149
      %p151 = scmp.eq.s32.totalorder %s22, 0
      %p152 = por %p150, %p151
      %p153 = scmp.le.s32.totalorder 1, %s16
      %p154 = scmp.lt.s32.totalorder %s16, 3
      %p155 = pnand %p153, %p154
      %p156 = pneg %p155
      // Predicated region
      $region9: #{tpu_custom_call.1} parent=5 // pred_check
        _
      $region10: #{tpu_custom_call.1} parent=5 // pred_check_branch
        %158 = sbr.rel (%p155) target = $region12
      $region11: #{tpu_custom_call.1} parent=5 // pred_region
        %s159 = ssub.s32 %s16, 1
        // Predicated region
        $region13: #{tpu_custom_call.1} parent=11 // pred_check
          %p160 = pneg %p63
        $region14: #{tpu_custom_call.1} parent=11 // pred_check_branch
          %162 = sbr.rel (%p160) target = $region16
        $region15: #{tpu_custom_call.1} parent=11 // pred_region
          %s163 = smul.u32 8, %s26
          %s164 = smul.u32 2, %s28
          %s166 = ssub.s32 1024, 1024
          %167 = vsyncadd [#allocation4], %s166
          %s168 = smul.addr %s163, 2
          %s169 = sadd.s32 %s164, %s168
          %s170 = smul.addr %s169, 64
          %s171 = scalar_lea.hbm %s0, %s170
          %s172 = sshll.u32 [#allocation3], 4
          %s173 = int_to_ptr.vmem [resolvable:$true] %s172
          %178 = dma.hbm_to_vmem [thread:$0]  %s171, 1024, %s173, [#allocation4], 128, 128, 8
        $region16: #{tpu_custom_call.1} parent=11 // pred_fallthru
          _
      $region12: #{tpu_custom_call.1} parent=5 // pred_fallthru
        _
      %p179 = scmp.lt.s32.totalorder %s16, 2
      // Predicated region
      $region17: #{tpu_custom_call.1} parent=5 // pred_check
        %p180 = pneg %p179
      $region18: #{tpu_custom_call.1} parent=5 // pred_check_branch
        %182 = sbr.rel (%p180) target = $region20
      $region19: #{tpu_custom_call.1} parent=5 // pred_region
        // Predicated region
        $region21: #{tpu_custom_call.1} parent=19 // pred_check
          %p183 = pneg %p85
        $region22: #{tpu_custom_call.1} parent=19 // pred_check_branch
          %185 = sbr.rel (%p183) target = $region24
        $region23: #{tpu_custom_call.1} parent=19 // pred_region
          %s186 = sand.u32 %s75, 1
          %s187 = scalar_lea.sflag [#allocation7], %s186
          %s188 = sand.u32 %s75, 1
          %s189 = smul.addr %s188, 128
          %s190 = scalar_lea.vmem [#allocation6], %s189
          %s191 = smul.u32 32, %s25
          %s193 = ssub.s32 2048, 2048
          %194 = vsyncadd %s187, %s193
          %s195 = smul.addr %s191, 2
          %s196 = sadd.s32 %s24, %s195
          %s197 = smul.addr %s196, 64
          %s198 = scalar_lea.hbm %s1, %s197
          %s199 = sshll.u32 %s190, 4
          %s200 = int_to_ptr.vmem [resolvable:$true] %s199
          %205 = dma.hbm_to_vmem [thread:$0]  %s198, 2048, %s200, %s187, 128, 64, 4
        $region24: #{tpu_custom_call.1} parent=19 // pred_fallthru
          _
        // Predicated region
        $region25: #{tpu_custom_call.1} parent=19 // pred_check
          %p206 = pneg %p111
        $region26: #{tpu_custom_call.1} parent=19 // pred_check_branch
          %208 = sbr.rel (%p206) target = $region28
        $region27: #{tpu_custom_call.1} parent=19 // pred_region
          %p209 = scmp.lt.s32.totalorder %s24, 1
          %s210 = scalar_select %p209, %s24, 1
          %s211 = scalar_lea.vmem %s2, %s210
        $region28: #{tpu_custom_call.1} parent=19 // pred_fallthru
          _
      $region20: #{tpu_custom_call.1} parent=5 // pred_fallthru
        _
      %p212 = scmp.le.s32.totalorder 1, %s16
      %p213 = scmp.lt.s32.totalorder %s16, 3
      %p214 = pnand %p212, %p213
      %p215 = pneg %p214
      // Predicated region
      $region29: #{tpu_custom_call.1} parent=5 // pred_check
        _
      $region30: #{tpu_custom_call.1} parent=5 // pred_check_branch
        %217 = sbr.rel (%p214) target = $region32
      $region31: #{tpu_custom_call.1} parent=5 // pred_region
        %s218 = ssub.s32 %s16, 1
        // Predicated region
        $region33: #{tpu_custom_call.1} parent=31 // pred_check
          %p219 = pneg %p63
        $region34: #{tpu_custom_call.1} parent=31 // pred_check_branch
          %221 = sbr.rel (%p219) target = $region36
        $region35: #{tpu_custom_call.1} parent=31 // pred_region
          %222 = dma.done [#allocation4], 1024
        $region36: #{tpu_custom_call.1} parent=31 // pred_fallthru
          _
        %s223 = sand.u32 %s78, 1
        %s224 = scalar_lea.sflag [#allocation7], %s223
        %s225 = sand.u32 %s78, 1
        %s226 = smul.addr %s225, 128
        %s227 = scalar_lea.vmem [#allocation6], %s226
        // Predicated region
        $region37: #{tpu_custom_call.1} parent=31 // pred_check
          %p228 = pneg %p91
        $region38: #{tpu_custom_call.1} parent=31 // pred_check_branch
          %230 = sbr.rel (%p228) target = $region40
        $region39: #{tpu_custom_call.1} parent=31 // pred_region
          %231 = dma.done %s224, 2048
        $region40: #{tpu_custom_call.1} parent=31 // pred_fallthru
          _
        %p232 = pneg %p63
        %p233 = pneg %p60
        %s234 = sand.u32 %s78, 1
        %s235 = scalar_lea.sflag [#allocation7], %s234
        %s236 = sand.u32 %s78, 1
        %s237 = smul.addr %s236, 128
        %s238 = scalar_lea.vmem [#allocation6], %s237
        %p239 = pneg %p91
        %p240 = pneg %p88
        %p241 = scmp.lt.s32.totalorder %s27, 1
        %s242 = scalar_select %p241, %s27, 1
        %s243 = scalar_lea.vmem %s2, %s242
        %p244 = pneg %p117
        %p245 = pneg %p114
        %p246 = pneg %p145
        %p247 = pneg %p142
        %s248 = sand.u32 %s132, 1
        %s249 = scalar_lea.sflag [#allocation5], %s248
        %s250 = sand.u32 %s132, 1
        %s251 = smul.addr %s250, 32
        %s252 = scalar_lea.vmem [#allocation8], %s251
        %s253 = smul.u32 8, %s26
        %s254 = smul.u32 2, %s28
        %s255 = smul.u32 32, %s28
        %p256 = scmp.lt.s32.totalorder %s27, 1
        %s257 = scalar_select %p256, %s27, 1
        %s258 = scalar_lea.vmem %s2, %s257
        %s259 = smul.u32 8, %s26
        %p261 = scmp.eq.s32.totalorder %s28, 0
        // Predicated region
        $region41: #{tpu_custom_call.1} parent=31 // pred_check
          %p262 = pneg %p261
        $region42: #{tpu_custom_call.1} parent=31 // pred_check_branch
          %264 = sbr.rel (%p262) target = $region44
        $region43: #{tpu_custom_call.1} parent=31 // pred_region
          %v265 = vld [vmem:[%s258] sm:$0x1]
          %v266 = vunpack.c.l.bf16 %v265
          %v267 = vlaneseq
          %v268 = vshrl.u32 %v267, 7
          %v269 = vsub.s32 0, %v268
          %v270 = vrot.slane %v266, %v269
          %271 = vst [vmem:[#allocation2] sm:$0xff] %v270
          %272 = vst [vmem:[#allocation2 + $0x8] sm:$0xff] %v270
          %273 = vst [vmem:[#allocation2 + $0x10] sm:$0xff] %v270
          %274 = vst [vmem:[#allocation2 + $0x18] sm:$0xff] %v270
          %275 = vst [vmem:[#allocation2 + $0x20] sm:$0xff] %v270
          %276 = vst [vmem:[#allocation2 + $0x28] sm:$0xff] %v270
          %277 = vst [vmem:[#allocation2 + $0x30] sm:$0xff] %v270
          %278 = vst [vmem:[#allocation2 + $0x38] sm:$0xff] %v270
        $region44: #{tpu_custom_call.1} parent=31 // pred_fallthru
          _
        %v279 = vld [vmem:[#allocation2] sm:$0xff]
        %v280 = vld [vmem:[#allocation2 + $0x8] sm:$0xff]
        %v281 = vld [vmem:[#allocation2 + $0x10] sm:$0xff]
        %v282 = vld [vmem:[#allocation2 + $0x18] sm:$0xff]
        %v283 = vld [vmem:[#allocation2 + $0x20] sm:$0xff]
        %v284 = vld [vmem:[#allocation2 + $0x28] sm:$0xff]
        %v285 = vld [vmem:[#allocation2 + $0x30] sm:$0xff]
        %v286 = vld [vmem:[#allocation2 + $0x38] sm:$0xff]
        %v287 = vld [vmem:[#allocation3] sm:$0xff]
        %v288 = vld [vmem:[#allocation3 + $0x8] sm:$0xff]
        %v289 = vld [vmem:[#allocation3 + $0x10] sm:$0xff]
        %v290 = vld [vmem:[#allocation3 + $0x18] sm:$0xff]
        %v291 = vld [vmem:[#allocation3 + $0x20] sm:$0xff]
        %v292 = vld [vmem:[#allocation3 + $0x28] sm:$0xff]
        %v293 = vld [vmem:[#allocation3 + $0x30] sm:$0xff]
        %v294 = vld [vmem:[#allocation3 + $0x38] sm:$0xff]
        %v295 = vld [vmem:[%s227] sm:$0xf]
        %v296 = vld [vmem:[%s227 + $0x4] sm:$0xf]
        %v297 = vld [vmem:[%s227 + $0x8] sm:$0xf]
        %v298 = vld [vmem:[%s227 + $0xc] sm:$0xf]
        %v299 = vld [vmem:[%s227 + $0x10] sm:$0xf]
        %v300 = vld [vmem:[%s227 + $0x14] sm:$0xf]
        %v301 = vld [vmem:[%s227 + $0x18] sm:$0xf]
        %v302 = vld [vmem:[%s227 + $0x1c] sm:$0xf]
        %v303 = vld [vmem:[%s227 + $0x20] sm:$0xf]
        %v304 = vld [vmem:[%s227 + $0x24] sm:$0xf]
        %v305 = vld [vmem:[%s227 + $0x28] sm:$0xf]
        %v306 = vld [vmem:[%s227 + $0x2c] sm:$0xf]
        %v307 = vld [vmem:[%s227 + $0x30] sm:$0xf]
        %v308 = vld [vmem:[%s227 + $0x34] sm:$0xf]
        %v309 = vld [vmem:[%s227 + $0x38] sm:$0xf]
        %v310 = vld [vmem:[%s227 + $0x3c] sm:$0xf]
        %v311 = vld [vmem:[%s227 + $0x40] sm:$0xf]
        %v312 = vld [vmem:[%s227 + $0x44] sm:$0xf]
        %v313 = vld [vmem:[%s227 + $0x48] sm:$0xf]
        %v314 = vld [vmem:[%s227 + $0x4c] sm:$0xf]
        %v315 = vld [vmem:[%s227 + $0x50] sm:$0xf]
        %v316 = vld [vmem:[%s227 + $0x54] sm:$0xf]
        %v317 = vld [vmem:[%s227 + $0x58] sm:$0xf]
        %v318 = vld [vmem:[%s227 + $0x5c] sm:$0xf]
        %v319 = vld [vmem:[%s227 + $0x60] sm:$0xf]
        %v320 = vld [vmem:[%s227 + $0x64] sm:$0xf]
        %v321 = vld [vmem:[%s227 + $0x68] sm:$0xf]
        %v322 = vld [vmem:[%s227 + $0x6c] sm:$0xf]
        %v323 = vld [vmem:[%s227 + $0x70] sm:$0xf]
        %v324 = vld [vmem:[%s227 + $0x74] sm:$0xf]
        %v325 = vld [vmem:[%s227 + $0x78] sm:$0xf]
        %v326 = vld [vmem:[%s227 + $0x7c] sm:$0xf]
        %v335 = vunpack.c.l.b16 %v287
        %v336 = vunpack.c.h.b16 %v287
        %v337 = vunpack.c.l.b16 %v288
        %v338 = vunpack.c.h.b16 %v288
        %v339 = vunpack.c.l.b16 %v289
        %v340 = vunpack.c.h.b16 %v289
        %v341 = vunpack.c.l.b16 %v290
        %v342 = vunpack.c.h.b16 %v290
        %v343 = vunpack.c.l.b16 %v291
        %v344 = vunpack.c.h.b16 %v291
        %v345 = vunpack.c.l.b16 %v292
        %v346 = vunpack.c.h.b16 %v292
        %v347 = vunpack.c.l.b16 %v293
        %v348 = vunpack.c.h.b16 %v293
        %v349 = vunpack.c.l.b16 %v294
        %v350 = vunpack.c.h.b16 %v294
        %v351 = vpack.c.b16 %v337, %v335
        %v352 = vpack.c.b16 %v338, %v336
        %v353 = vpack.c.b16 %v341, %v339
        %v354 = vpack.c.b16 %v342, %v340
        %v355 = vpack.c.b16 %v345, %v343
        %v356 = vpack.c.b16 %v346, %v344
        %v357 = vpack.c.b16 %v349, %v347
        %v358 = vpack.c.b16 %v350, %v348
        %v399 = vunpack.c.l.b16 %v295
        %v400 = vunpack.c.l.b16 %v296
        %v401 = vunpack.c.l.b16 %v297
        %v402 = vunpack.c.l.b16 %v298
        %v403 = vunpack.c.l.b16 %v299
        %v404 = vunpack.c.l.b16 %v300
        %v405 = vunpack.c.l.b16 %v301
        %v406 = vunpack.c.l.b16 %v302
        %v407 = vunpack.c.l.b16 %v303
        %v408 = vunpack.c.l.b16 %v304
        %v409 = vunpack.c.l.b16 %v305
        %v410 = vunpack.c.l.b16 %v306
        %v411 = vunpack.c.l.b16 %v307
        %v412 = vunpack.c.l.b16 %v308
        %v413 = vunpack.c.l.b16 %v309
        %v414 = vunpack.c.l.b16 %v310
        %v415 = vunpack.c.l.b16 %v311
        %v416 = vunpack.c.l.b16 %v312
        %v417 = vunpack.c.l.b16 %v313
        %v418 = vunpack.c.l.b16 %v314
        %v419 = vunpack.c.l.b16 %v315
        %v420 = vunpack.c.l.b16 %v316
        %v421 = vunpack.c.l.b16 %v317
        %v422 = vunpack.c.l.b16 %v318
        %v423 = vunpack.c.l.b16 %v319
        %v424 = vunpack.c.l.b16 %v320
        %v425 = vunpack.c.l.b16 %v321
        %v426 = vunpack.c.l.b16 %v322
        %v427 = vunpack.c.l.b16 %v323
        %v428 = vunpack.c.l.b16 %v324
        %v429 = vunpack.c.l.b16 %v325
        %v430 = vunpack.c.l.b16 %v326
        %v431 = vpack.c.b16 %v400, %v399
        %v432 = vpack.c.b16 %v402, %v401
        %v433 = vpack.c.b16 %v404, %v403
        %v434 = vpack.c.b16 %v406, %v405
        %v435 = vpack.c.b16 %v408, %v407
        %v436 = vpack.c.b16 %v410, %v409
        %v437 = vpack.c.b16 %v412, %v411
        %v438 = vpack.c.b16 %v414, %v413
        %v439 = vpack.c.b16 %v416, %v415
        %v440 = vpack.c.b16 %v418, %v417
        %v441 = vpack.c.b16 %v420, %v419
        %v442 = vpack.c.b16 %v422, %v421
        %v443 = vpack.c.b16 %v424, %v423
        %v444 = vpack.c.b16 %v426, %v425
        %v445 = vpack.c.b16 %v428, %v427
        %v446 = vpack.c.b16 %v430, %v429
        %463 = vmatprep.subr.bf16.mxu0 0
        %464 = vmatpush1.bf16.msra.mxu0 %v431
        %465 = vmatprep.subr.bf16.mxu0 0
        %466 = vmatpush1.bf16.msra.mxu0 %v432
        %467 = vmatprep.subr.bf16.mxu0 0
        %468 = vmatpush1.bf16.msra.mxu0 %v433
        %469 = vmatprep.subr.bf16.mxu0 0
        %470 = vmatpush1.bf16.msra.mxu0 %v434
        %471 = vmatprep.subr.bf16.mxu0 0
        %472 = vmatpush1.bf16.msra.mxu0 %v435
        %473 = vmatprep.subr.bf16.mxu0 0
        %474 = vmatpush1.bf16.msra.mxu0 %v436
        %475 = vmatprep.subr.bf16.mxu0 0
        %476 = vmatpush1.bf16.msra.mxu0 %v437
        %477 = vmatprep.subr.bf16.mxu0 0
        %478 = vmatpush1.bf16.msra.mxu0 %v438
        %479 = vmatprep.subr.bf16.mxu0 0
        %480 = vmatpush1.bf16.msra.mxu0 %v439
        %481 = vmatprep.subr.bf16.mxu0 0
        %482 = vmatpush1.bf16.msra.mxu0 %v440
        %483 = vmatprep.subr.bf16.mxu0 0
        %484 = vmatpush1.bf16.msra.mxu0 %v441
        %485 = vmatprep.subr.bf16.mxu0 0
        %486 = vmatpush1.bf16.msra.mxu0 %v442
        %487 = vmatprep.subr.bf16.mxu0 0
        %488 = vmatpush1.bf16.msra.mxu0 %v443
        %489 = vmatprep.subr.bf16.mxu0 0
        %490 = vmatpush1.bf16.msra.mxu0 %v444
        %491 = vmatprep.subr.bf16.mxu0 0
        %492 = vmatpush1.bf16.msra.mxu0 %v445
        %493 = vmatprep.subr.bf16.mxu0 0
        %494 = vmatpush1.bf16.msra.mxu0 %v446
        %495 = vmatprep.mubr.bf16.mxu0 %v352
        %496 = vmatmul.mubr.bf16.gmra.mrb[0].mxu0 %v351
        %v497 = vpop.f32.mrb[0].mxu0
        %v498 = vadd.f32 0.0, %v497
        %v499 = vpop.f32.mrb[0].mxu0
        %v500 = vpop.f32.mrb[0].mxu0
        %v501 = vadd.f32 0.0, %v500
        %v502 = vpop.f32.mrb[0].mxu0
        %503 = vmatprep.mubr.bf16.mxu0 %v354
        %504 = vmatmul.mubr.bf16.gmra.mrb[0].mxu0 %v353
        %v505 = vpop.f32.mrb[0].mxu0
        %v506 = vadd.f32 0.0, %v505
        %v507 = vpop.f32.mrb[0].mxu0
        %v508 = vpop.f32.mrb[0].mxu0
        %v509 = vadd.f32 0.0, %v508
        %v510 = vpop.f32.mrb[0].mxu0
        %511 = vmatprep.mubr.bf16.mxu0 %v356
        %512 = vmatmul.mubr.bf16.gmra.mrb[0].mxu0 %v355
        %v513 = vpop.f32.mrb[0].mxu0
        %v514 = vadd.f32 0.0, %v513
        %v515 = vpop.f32.mrb[0].mxu0
        %v516 = vpop.f32.mrb[0].mxu0
        %v517 = vadd.f32 0.0, %v516
        %v518 = vpop.f32.mrb[0].mxu0
        %519 = vmatprep.mubr.bf16.mxu0 %v358
        %520 = vmatmul.mubr.bf16.gmra.mrb[0].mxu0 %v357
        %v521 = vpop.f32.mrb[0].mxu0
        %v522 = vadd.f32 0.0, %v521
        %v523 = vpop.f32.mrb[0].mxu0
        %v524 = vpop.f32.mrb[0].mxu0
        %v525 = vadd.f32 0.0, %v524
        %v526 = vpop.f32.mrb[0].mxu0
        %527 = vdwg.mxu0
        %v528 = vadd.f32 %v279, %v498
        %v529 = vadd.f32 %v280, %v501
        %v530 = vadd.f32 %v281, %v506
        %v531 = vadd.f32 %v282, %v509
        %v532 = vadd.f32 %v283, %v514
        %v533 = vadd.f32 %v284, %v517
        %v534 = vadd.f32 %v285, %v522
        %v535 = vadd.f32 %v286, %v525
        %536 = vst [vmem:[#allocation2] sm:$0xff] %v528
        %537 = vst [vmem:[#allocation2 + $0x8] sm:$0xff] %v529
        %538 = vst [vmem:[#allocation2 + $0x10] sm:$0xff] %v530
        %539 = vst [vmem:[#allocation2 + $0x18] sm:$0xff] %v531
        %540 = vst [vmem:[#allocation2 + $0x20] sm:$0xff] %v532
        %541 = vst [vmem:[#allocation2 + $0x28] sm:$0xff] %v533
        %542 = vst [vmem:[#allocation2 + $0x30] sm:$0xff] %v534
        %543 = vst [vmem:[#allocation2 + $0x38] sm:$0xff] %v535
        // Predicated region
        $region45: #{tpu_custom_call.1} parent=31 // pred_check
          %p544 = pneg %p261
        $region46: #{tpu_custom_call.1} parent=31 // pred_check_branch
          %546 = sbr.rel (%p544) target = $region48
        $region47: #{tpu_custom_call.1} parent=31 // pred_region
          %v547 = vld [vmem:[#allocation2] sm:$0xff]
          %v548 = vld [vmem:[#allocation2 + $0x8] sm:$0xff]
          %v549 = vld [vmem:[#allocation2 + $0x10] sm:$0xff]
          %v550 = vld [vmem:[#allocation2 + $0x18] sm:$0xff]
          %v551 = vld [vmem:[#allocation2 + $0x20] sm:$0xff]
          %v552 = vld [vmem:[#allocation2 + $0x28] sm:$0xff]
          %v553 = vld [vmem:[#allocation2 + $0x30] sm:$0xff]
          %v554 = vld [vmem:[#allocation2 + $0x38] sm:$0xff]
          %v555 = vpack.c.bf16 %v548, %v547
          %v556 = vpack.c.bf16 %v550, %v549
          %v557 = vpack.c.bf16 %v552, %v551
          %v558 = vpack.c.bf16 %v554, %v553
          %v563 = vunpack.c.l.b16 %v555
          %v564 = vunpack.c.h.b16 %v555
          %v565 = vunpack.c.l.b16 %v556
          %v566 = vunpack.c.h.b16 %v556
          %v567 = vunpack.c.l.b16 %v557
          %v568 = vunpack.c.h.b16 %v557
          %v569 = vunpack.c.l.b16 %v558
          %v570 = vunpack.c.h.b16 %v558
          %v571 = vpack.c.b16 %v563, %v563
          %v572 = vpack.c.b16 %v564, %v564
          %v573 = vpack.c.b16 %v565, %v565
          %v574 = vpack.c.b16 %v566, %v566
          %v575 = vpack.c.b16 %v567, %v567
          %v576 = vpack.c.b16 %v568, %v568
          %v577 = vpack.c.b16 %v569, %v569
          %v578 = vpack.c.b16 %v570, %v570
          %587 = vst [vmem:[%s252] sm:$0xf] %v571
          %588 = vst [vmem:[%s252 + $0x4] sm:$0xf] %v572
          %589 = vst [vmem:[%s252 + $0x8] sm:$0xf] %v573
          %590 = vst [vmem:[%s252 + $0xc] sm:$0xf] %v574
          %591 = vst [vmem:[%s252 + $0x10] sm:$0xf] %v575
          %592 = vst [vmem:[%s252 + $0x14] sm:$0xf] %v576
          %593 = vst [vmem:[%s252 + $0x18] sm:$0xf] %v577
          %594 = vst [vmem:[%s252 + $0x1c] sm:$0xf] %v578
        $region48: #{tpu_custom_call.1} parent=31 // pred_fallthru
          _
        %s595 = sand.u32 %s132, 1
        %s596 = scalar_lea.sflag [#allocation5], %s595
        %s597 = sand.u32 %s132, 1
        %s598 = smul.addr %s597, 32
        %s599 = scalar_lea.vmem [#allocation8], %s598
        // Predicated region
        $region49: #{tpu_custom_call.1} parent=31 // pred_check
          %p600 = pneg %p142
        $region50: #{tpu_custom_call.1} parent=31 // pred_check_branch
          %602 = sbr.rel (%p600) target = $region52
        $region51: #{tpu_custom_call.1} parent=31 // pred_region
          %s603 = smul.u32 8, %s26
          %s605 = ssub.s32 512, 512
          %606 = vsyncadd %s596, %s605
          %s607 = smul.addr %s603, 2
          %s608 = sadd.s32 %s27, %s607
          %s609 = smul.addr %s608, 64
          %s610 = scalar_lea.hbm %s3, %s609
          %s611 = sshll.u32 %s599, 4
          %s612 = int_to_ptr.vmem [resolvable:$true] %s611
          %617 = dma.vmem_to_hbm [thread:$0]  %s612, 512, %s610, %s596, 64, 128, 4
        $region52: #{tpu_custom_call.1} parent=31 // pred_fallthru
          _
      $region32: #{tpu_custom_call.1} parent=5 // pred_fallthru
        _
      %p618 = scmp.le.s32.totalorder 2, %s16
      // Predicated region
      $region53: #{tpu_custom_call.1} parent=5 // pred_check
        %p619 = pneg %p618
      $region54: #{tpu_custom_call.1} parent=5 // pred_check_branch
        %621 = sbr.rel (%p619) target = $region56
      $region55: #{tpu_custom_call.1} parent=5 // pred_region
        %s622 = ssub.s32 %s16, 2
        // Predicated region
        $region57: #{tpu_custom_call.1} parent=55 // pred_check
          %p623 = pneg %p148
        $region58: #{tpu_custom_call.1} parent=55 // pred_check_branch
          %625 = sbr.rel (%p623) target = $region60
        $region59: #{tpu_custom_call.1} parent=55 // pred_region
          %s626 = sand.u32 %s133, 1
          %s627 = scalar_lea.sflag [#allocation5], %s626
          %s628 = sand.u32 %s133, 1
          %s629 = smul.addr %s628, 32
          %s630 = scalar_lea.vmem [#allocation8], %s629
          %631 = dma.done %s627, 512
        $region60: #{tpu_custom_call.1} parent=55 // pred_fallthru
          _
      $region56: #{tpu_custom_call.1} parent=5 // pred_fallthru
        _
    $region6: #{tpu_custom_call.1} parent=1 // loop_footer
      %s20 = sadd.s32 1, %s16
    $region7: #{tpu_custom_call.1} parent=1 // loop_footer_branch
      %15 = sbr.rel target = $region3
    $region8: #{tpu_custom_call.1} parent=1 // loop_exit
      _
    %632 = vsyncpa [#allocation4], 1
    %s633 = scalar_lea.sflag [#allocation4], 1
    %634 = vsyncpa %s633, 1
    %635 = vsyncpa [#allocation7], 1
    %s636 = scalar_lea.sflag [#allocation7], 1
    %637 = vsyncpa %s636, 1
    %638 = vsyncpa [#allocation5], 1
    %s639 = scalar_lea.sflag [#allocation5], 1
    %640 = vsyncpa %s639, 1

</llo_original>
